<compile_context>
chip_gen: v7x
topology: tpu7x:2x2x1
jax: 0.10.0
libtpu: 0.0.40
codegen_flags: <defaults>
</compile_context>

<pallas_src>
import functools

import numpy as np
import jax
import jax.numpy as jnp
from jax.experimental import pallas as pl
from jax.experimental.pallas import tpu as pltpu


def dummy_positional_embedding_forward(input, offset=0):
    """Literal DummyPositionalEmbedding.forward: always returns the scalar 0.0."""
    return jnp.float32(0.0)


# ---------------------------------------------------------------------------
# ALiBi bias kernel
# ---------------------------------------------------------------------------

def _alibi_kernel(offset_ref, slope_ref, o_ref, *, num_heads, hblk, tT, tS, causal):
    # grid = (Bout, num_heads // hblk, T // tT, S // tS); all axes "parallel"
    b = pl.program_id(0)
    hb = pl.program_id(1)
    ti = pl.program_id(2)
    si = pl.program_id(3)

    off = offset_ref[b]                       # int32 scalar from SMEM

    # Grid-invariant-across-heads part: computed once per (b, t-tile, s-tile)
    # and reused for every head written by this grid step.
    t_idx = ti * tT + jax.lax.broadcasted_iota(jnp.int32, (tT, tS), 0)  # query pos
    s_idx = si * tS + jax.lax.broadcasted_iota(jnp.int32, (tT, tS), 1)  # key pos
    neg_abs = -jnp.abs(s_idx - (t_idx + off)).astype(jnp.float32)
    if not causal:
        upper = s_idx > t_idx                 # strictly upper triangle

    for hh in range(hblk):                    # static unroll; hblk kept small
        h = hb * hblk + hh
        slope = slope_ref[h]                  # float32 scalar from SMEM
        bias = neg_abs * slope                # single VALU op per output vreg
        if not causal:
            # first half of heads: only attend left (+ self); second half: right.
            mask = jnp.logical_xor(upper, h >= num_heads // 2)
            bias = jnp.where(mask, -jnp.inf, bias)
        o_ref[0, hh, :, :] = bias.astype(o_ref.dtype)


def _largest_exact_tile(dim, unit, cap):
    """Largest multiple of `unit` that divides `dim` and is <= cap; else full dim."""
    if dim <= cap or dim % unit != 0:
        return dim                            # full extent is always legal
    best = unit
    d = unit
    while d <= cap:
        if dim % d == 0:
            best = d
        d += unit
    return best


def _choose_tiles(T, S, num_heads, itemsize,
                  max_tile_t=256, max_tile_s=2048, block_budget_bytes=8 << 20):
    tT = _largest_exact_tile(T, 8, max_tile_t)     # dense sublanes
    tS = _largest_exact_tile(S, 128, max_tile_s)   # lane-dense (>=128) stores
    per_head = tT * tS * itemsize
    hblk = max(1, min(num_heads, block_budget_bytes // max(per_head, 1)))
    while num_heads % hblk:                        # keep head blocks exact
        hblk -= 1
    return tT, tS, hblk


def make_alibi_slopes(num_heads, shard_id=0, shard_count=1, max_bias=8):
    slopes = (2.0 ** (-max_bias / num_heads)) ** (
        jnp.arange(num_heads, dtype=jnp.float32) + 1.0
    )
    nh = num_heads // shard_count
    return slopes[shard_id * nh:(shard_id + 1) * nh]


def alibi_forward(query, key, slopes, offset=0, causal=True,
                  tile_t=None, tile_s=None, head_block=None):
    B, T, _, _ = query.shape
    S = key.shape[1]
    nh = slopes.shape[0]

    if isinstance(offset, jnp.ndarray) and offset.ndim == 1:
        offsets = offset.astype(jnp.int32)
        Bout = B
    else:
        offsets = jnp.full((1,), int(offset), dtype=jnp.int32)
        Bout = 1

    if not causal:
        assert T == S, "non-causal ALiBi requires query_len == key_len"
        assert nh % 2 == 0

    out_dtype = query.dtype
    itemsize = jnp.dtype(out_dtype).itemsize
    tT, tS, hblk = _choose_tiles(T, S, nh, itemsize)
    if tile_t is not None:
        tT = tile_t
    if tile_s is not None:
        tS = tile_s
    if head_block is not None:
        hblk = head_block
    assert T % tT == 0 and S % tS == 0 and nh % hblk == 0

    # match torch: slopes are cast to the query dtype before the multiply
    slopes_f32 = slopes.astype(out_dtype).astype(jnp.float32)

    kernel = functools.partial(_alibi_kernel, num_heads=nh, hblk=hblk,
                               tT=tT, tS=tS, causal=causal)

    grid = (Bout, nh // hblk, T // tT, S // tS)
    out = pl.pallas_call(
        kernel,
        out_shape=jax.ShapeDtypeStruct((Bout, nh, T, S), out_dtype),
        grid_spec=pltpu.PrefetchScalarGridSpec(
            num_scalar_prefetch=2,                  # offsets, slopes -> SMEM
            grid=grid,
            in_specs=[],
            out_specs=pl.BlockSpec(
                (1, hblk, tT, tS),
                lambda b, hb, ti, si, off, sl: (b, hb, ti, si)),
        ),
        compiler_params=pltpu.CompilerParams(
            dimension_semantics=("parallel",) * 4,  # shard across v7x's 2 TCs
            vmem_limit_bytes=32 * 1024 * 1024),     # > v5e 16 MiB default, < v7x 64 MiB
    )(offsets, slopes_f32)
    return out


# ---------------------------------------------------------------------------
# pure-JAX reference mirroring the PyTorch forward
# ---------------------------------------------------------------------------

def alibi_ref(query, key, slopes, offset=0, causal=True):
    T, S = query.shape[1], key.shape[1]
    nh = slopes.shape[0]
    qpos = jnp.arange(T)[None, None, :, None]
    kpos = jnp.arange(S)[None, None, None, :]
    if isinstance(offset, jnp.ndarray) and offset.ndim == 1:
        qpos = qpos + offset[:, None, None, None]
    else:
        qpos = qpos + offset
    rel = -jnp.abs(kpos - qpos)
    alibi = slopes.astype(query.dtype)[None, :, None, None] * rel
    alibi = jnp.broadcast_to(alibi, (rel.shape[0], nh, T, S))
    if not causal:
        m = jnp.triu(jnp.ones((T, T), bool), 1)
        m = jnp.concatenate(
            [jnp.broadcast_to(m, (nh // 2, T, T)),
             jnp.broadcast_to(~m, (nh // 2, T, T))], axis=0)
        alibi = jnp.where(m[None], -jnp.inf, alibi)
    return alibi.astype(query.dtype)


if __name__ == "__main__":
    key_rng = jax.random.PRNGKey(0)
    kq, kk = jax.random.split(key_rng)

    # --- literal DummyPositionalEmbedding semantics ------------------------
    B, T, S, H, D = 2, 8, 8, 4, 32
    query = jax.random.normal(kq, (B, T, H, D), dtype=jnp.float32)
    key = jax.random.normal(kk, (B, S, H, D), dtype=jnp.float32)
    assert float(dummy_positional_embedding_forward(query)) == 0.0

    slopes = make_alibi_slopes(num_heads=H)

    # causal case with per-batch offsets (incremental-decoding style)
    offsets = jnp.array([0, 3], dtype=jnp.int32)
    out_causal = alibi_forward(query, key, slopes, offset=offsets, causal=True)
    jax.block_until_ready(out_causal)
    ref_causal = alibi_ref(query, key, slopes, offset=offsets, causal=True)
    np.testing.assert_allclose(np.asarray(out_causal), np.asarray(ref_causal),
                               rtol=1e-6, atol=1e-6)

    # non-causal (encoder self-attention) case with integer offset
    out_nc = alibi_forward(query, key, slopes, offset=0, causal=False)
    jax.block_until_ready(out_nc)
    ref_nc = alibi_ref(query, key, slopes, offset=0, causal=False)
    np.testing.assert_allclose(np.asarray(out_nc), np.asarray(ref_nc),
                               rtol=1e-6, atol=1e-6)

    # tiled path: T/S tiles in the grid + head folding (exercises the new grid)
    kq2, kk2 = jax.random.split(kk)
    B2, T2, S2, H2 = 1, 16, 256, 8
    query2 = jax.random.normal(kq2, (B2, T2, H2, D), dtype=jnp.float32)
    key2 = jax.random.normal(kk2, (B2, S2, H2, D), dtype=jnp.float32)
    slopes2 = make_alibi_slopes(num_heads=H2)
    out_t = alibi_forward(query2, key2, slopes2, offset=2, causal=True,
                          tile_t=8, tile_s=128, head_block=2)
    jax.block_until_ready(out_t)
    ref_t = alibi_ref(query2, key2, slopes2, offset=2, causal=True)
    np.testing.assert_allclose(np.asarray(out_t), np.asarray(ref_t),
                               rtol=1e-6, atol=1e-6)

    print("KERNEL_OK")
</pallas_src>

<mosaic_0001>
module attributes {stable_mosaic.version = 11 : i64} {
  func.func @_alibi_kernel(%arg0: i32, %arg1: i32, %arg2: i32, %arg3: i32, %arg4: memref<2xi32, #tpu.memory_space<smem>>, %arg5: memref<4xf32, #tpu.memory_space<smem>>, %arg6: memref<1x4x8x8xf32, #tpu.memory_space<vmem>>) attributes {dimension_semantics = [#tpu.dimension_semantics<parallel>, #tpu.dimension_semantics<parallel>, #tpu.dimension_semantics<parallel>, #tpu.dimension_semantics<parallel>], iteration_bounds = array<i64: 2, 1, 1, 1>, scalar_prefetch = 2 : i64, scratch_operands = 0 : i64, tpu.core_type = #tpu.core_type<tc>, window_params = [{transform_indices = @transform_0, window_bounds = array<i64: 1, 4, 8, 8>}]} {
    %0 = arith.index_cast %arg0 : i32 to index
    %1 = memref.load %arg4[%0] : memref<2xi32, #tpu.memory_space<smem>>
    %c8_i32 = arith.constant 8 : i32
    %2 = arith.muli %arg2, %c8_i32 : i32
    %3 = tpu.iota {dimensions = array<i32: 0>} : vector<8x8xi32>
    %4 = vector.broadcast %2 : i32 to vector<8x8xi32>
    %5 = arith.addi %4, %3 : vector<8x8xi32>
    %c8_i32_0 = arith.constant 8 : i32
    %6 = arith.muli %arg3, %c8_i32_0 : i32
    %7 = tpu.iota {dimensions = array<i32: 1>} : vector<8x8xi32>
    %8 = vector.broadcast %6 : i32 to vector<8x8xi32>
    %9 = arith.addi %8, %7 : vector<8x8xi32>
    %10 = vector.broadcast %1 : i32 to vector<8x8xi32>
    %11 = arith.addi %5, %10 : vector<8x8xi32>
    %12 = arith.subi %9, %11 : vector<8x8xi32>
    %13 = math.absi %12 : vector<8x8xi32>
    %14 = arith.sitofp %13 : vector<8x8xi32> to vector<8x8xf32>
    %cst = arith.constant 0.000000e+00 : f32
    %15 = vector.broadcast %cst : f32 to vector<8x8xf32>
    %16 = arith.subf %15, %14 : vector<8x8xf32>
    %c4_i32 = arith.constant 4 : i32
    %17 = arith.muli %arg1, %c4_i32 : i32
    %c0_i32 = arith.constant 0 : i32
    %18 = arith.addi %17, %c0_i32 : i32
    %19 = arith.index_cast %18 : i32 to index
    %20 = memref.load %arg5[%19] : memref<4xf32, #tpu.memory_space<smem>>
    %21 = vector.broadcast %20 : f32 to vector<8x8xf32>
    %22 = arith.mulf %16, %21 : vector<8x8xf32>
    %c0 = arith.constant 0 : index
    %c0_1 = arith.constant 0 : index
    %c0_2 = arith.constant 0 : index
    %c0_3 = arith.constant 0 : index
    %23 = vector.load %arg6[%c0, %c0_1, %c0_2, %c0_3] : memref<1x4x8x8xf32, #tpu.memory_space<vmem>>, vector<1x1x8x8xf32>
    %24 = vector.shape_cast %23 : vector<1x1x8x8xf32> to vector<8x8xf32>
    %25 = vector.shape_cast %22 : vector<8x8xf32> to vector<1x1x8x8xf32>
    tpu.vector_store %arg6[%c0, %c0_1, %c0_2, %c0_3], %25 {strides = array<i32>} : memref<1x4x8x8xf32, #tpu.memory_space<vmem>>, vector<1x1x8x8xf32>,
    %c4_i32_4 = arith.constant 4 : i32
    %26 = arith.muli %arg1, %c4_i32_4 : i32
    %c1_i32 = arith.constant 1 : i32
    %27 = arith.addi %26, %c1_i32 : i32
    %28 = arith.index_cast %27 : i32 to index
    %29 = memref.load %arg5[%28] : memref<4xf32, #tpu.memory_space<smem>>
    %30 = vector.broadcast %29 : f32 to vector<8x8xf32>
    %31 = arith.mulf %16, %30 : vector<8x8xf32>
    %c0_5 = arith.constant 0 : index
    %c1 = arith.constant 1 : index
    %c0_6 = arith.constant 0 : index
    %c0_7 = arith.constant 0 : index
    %32 = vector.load %arg6[%c0_5, %c1, %c0_6, %c0_7] : memref<1x4x8x8xf32, #tpu.memory_space<vmem>>, vector<1x1x8x8xf32>
    %33 = vector.shape_cast %32 : vector<1x1x8x8xf32> to vector<8x8xf32>
    %34 = vector.shape_cast %31 : vector<8x8xf32> to vector<1x1x8x8xf32>
    tpu.vector_store %arg6[%c0_5, %c1, %c0_6, %c0_7], %34 {strides = array<i32>} : memref<1x4x8x8xf32, #tpu.memory_space<vmem>>, vector<1x1x8x8xf32>,
    %c4_i32_8 = arith.constant 4 : i32
    %35 = arith.muli %arg1, %c4_i32_8 : i32
    %c2_i32 = arith.constant 2 : i32
    %36 = arith.addi %35, %c2_i32 : i32
    %37 = arith.index_cast %36 : i32 to index
    %38 = memref.load %arg5[%37] : memref<4xf32, #tpu.memory_space<smem>>
    %39 = vector.broadcast %38 : f32 to vector<8x8xf32>
    %40 = arith.mulf %16, %39 : vector<8x8xf32>
    %c0_9 = arith.constant 0 : index
    %c2 = arith.constant 2 : index
    %c0_10 = arith.constant 0 : index
    %c0_11 = arith.constant 0 : index
    %41 = vector.load %arg6[%c0_9, %c2, %c0_10, %c0_11] : memref<1x4x8x8xf32, #tpu.memory_space<vmem>>, vector<1x1x8x8xf32>
    %42 = vector.shape_cast %41 : vector<1x1x8x8xf32> to vector<8x8xf32>
    %43 = vector.shape_cast %40 : vector<8x8xf32> to vector<1x1x8x8xf32>
    tpu.vector_store %arg6[%c0_9, %c2, %c0_10, %c0_11], %43 {strides = array<i32>} : memref<1x4x8x8xf32, #tpu.memory_space<vmem>>, vector<1x1x8x8xf32>,
    %c4_i32_12 = arith.constant 4 : i32
    %44 = arith.muli %arg1, %c4_i32_12 : i32
    %c3_i32 = arith.constant 3 : i32
    %45 = arith.addi %44, %c3_i32 : i32
    %46 = arith.index_cast %45 : i32 to index
    %47 = memref.load %arg5[%46] : memref<4xf32, #tpu.memory_space<smem>>
    %48 = vector.broadcast %47 : f32 to vector<8x8xf32>
    %49 = arith.mulf %16, %48 : vector<8x8xf32>
    %c0_13 = arith.constant 0 : index
    %c3 = arith.constant 3 : index
    %c0_14 = arith.constant 0 : index
    %c0_15 = arith.constant 0 : index
    %50 = vector.load %arg6[%c0_13, %c3, %c0_14, %c0_15] : memref<1x4x8x8xf32, #tpu.memory_space<vmem>>, vector<1x1x8x8xf32>
    %51 = vector.shape_cast %50 : vector<1x1x8x8xf32> to vector<8x8xf32>
    %52 = vector.shape_cast %49 : vector<8x8xf32> to vector<1x1x8x8xf32>
    tpu.vector_store %arg6[%c0_13, %c3, %c0_14, %c0_15], %52 {strides = array<i32>} : memref<1x4x8x8xf32, #tpu.memory_space<vmem>>, vector<1x1x8x8xf32>,
    return
  }
  func.func @transform_0(%arg0: i32, %arg1: i32, %arg2: i32, %arg3: i32, %arg4: memref<2xi32, #tpu.memory_space<smem>>, %arg5: memref<4xf32, #tpu.memory_space<smem>>) -> (i32, i32, i32, i32) {
    %c0_i32 = arith.constant 0 : i32
    return %arg0, %arg1, %arg2, %arg3 : i32, i32, i32, i32
  }
}

</mosaic_0001>

<llo_original>
// kernel: tpu_custom_call.1
$region0: #{tpu_custom_call.1}
  #allocation0 [shape = 'u32[]', space=smem, size = 0x4, offset = 0x4, fixed_abs, tag = 'smem constant byte address 0x4 - core index']
  #allocation1 [shape = 'u32[144,128]{1,0:T(1,128)}', space=vmem, size = 0x12000, scoped, tag = 'internal scratch']
  #allocation2 [shape = 's32[1]{0}', space=sflag, size = 0x4, scoped, tag = 'scoped memory for tpu_custom_call.1']
  #allocation3 [shape = 'u8[512]{0}', space=smem, size = 0x200, scoped, tag = 'prefetched SMEM operand 0']
  #allocation4 [shape = 'u8[512]{0}', space=smem, size = 0x200, scoped, tag = 'prefetched SMEM operand 1']
  %s0 = inlined_call_operand.hbm [shape: s32[2], index: 0, kind: input, shape index: {}]
  %s1 = inlined_call_operand.vmem [shape: f32[4], index: 1, kind: input, shape index: {}]
  %s2 = inlined_call_operand.hbm [shape: f32[2,4,8,8], index: 2, kind: output, shape index: {}]
  %s3 = sld [smem:[#allocation0]]
  $region25: #{tpu_custom_call.1} parent=0
    _
  %s5 = ssub.s32 1, %s3
  %s6 = scalar_select 0, %s5, %s3
  %8 = dma.hbm_to_smem %s0, 16, [#allocation3], [#allocation2]
  %s9 = sshll.u32 %s1, 4
  %s10 = int_to_ptr.vmem [resolvable:$true] %s9
  %12 = dma.vmem_to_smem %s10, 16, [#allocation4], [#allocation2]
  %13 = dma.done [#allocation2], 32
  %14 = sfence
  $region1: #{tpu_custom_call.1} parent=0
    #allocation5 [shape = 'u8[32768]{0}', space=vmem, size = 0x8000, scoped, tag = 'output window, operand 0']
    #allocation6 [shape = 's32[2]{0}', space=sflag, size = 0x8, scoped, tag = 'scoped memory for tpu_custom_call.1']
    %15 = vsyncpa [#allocation6], 0
    %s16 = scalar_lea.sflag [#allocation6], 1
    %17 = vsyncpa %s16, 0
    loop: start=0, step=1, limit=3
    $region2: #{tpu_custom_call.1} parent=1 // loop_pre_header
      _
    $region3: #{tpu_custom_call.1} parent=1 // loop_header
      %s19 = sphi 0, %s23
      %p20 = scmp.ge.s32.totalorder %s19, 3
      %s25 = sphi 0, %s47
      %s26 = sphi 0, %s43
      %s27 = sphi 0, %s39
      %s28 = sphi 0, %s35
      %s29 = sphi 0, %s25
      %s30 = sphi 0, %s26
      %s31 = sphi 0, %s27
      %s32 = sphi 0, %s28
      %s56 = sphi 0, %s58
      %s59 = sphi 0, %s56
      %s69 = sphi 0, %s59
    $region4: #{tpu_custom_call.1} parent=1 // loop_header_branch
      %22 = sbr.rel (%p20) target = $region8
    $region5: #{tpu_custom_call.1} parent=1 // loop_body
      %s24 = ssub.s32 %s19, 1
      %s33 = sadd.s32 1, %s28
      %p34 = scmp.ge.s32.totalorder %s33, 1
      %s35 = scalar_select %p34, 0, %s33
      %s36 = sadd.s32 1, %s27
      %s37 = scalar_select %p34, %s36, %s27
      %p38 = scmp.ge.s32.totalorder %s37, 1
      %s39 = scalar_select %p38, 0, %s37
      %s40 = sadd.s32 1, %s26
      %s41 = scalar_select %p38, %s40, %s26
      %p42 = scmp.ge.s32.totalorder %s41, 1
      %s43 = scalar_select %p42, 0, %s41
      %s44 = sadd.s32 1, %s25
      %s45 = scalar_select %p42, %s44, %s25
      %p46 = scmp.ge.s32.totalorder %s45, 2
      %s47 = scalar_select %p46, 0, %s45
      %s48 = ssub.s32 %s25, %s47
      %s49 = ssub.s32 %s26, %s43
      %s50 = sor.u32 %s48, %s49
      %s51 = ssub.s32 %s27, %s39
      %s52 = sor.u32 %s50, %s51
      %s53 = ssub.s32 %s28, %s35
      %s54 = sor.u32 %s52, %s53
      %p55 = scmp.eq.s32.totalorder %s54, 0
      %s57 = sadd.s32 %s56, 1
      %s58 = scalar_select %p55, %s56, %s57
      %p60 = pneg %p55
      %p61 = scmp.eq.s32.totalorder %s19, 1
      %p62 = por %p60, %p61
      %p63 = scmp.ne.s32.totalorder %s56, %s59
      %p64 = scmp.eq.s32.totalorder %s19, 0
      %p65 = por %p63, %p64
      %p66 = scmp.ne.s32.totalorder %s56, %s59
      %p67 = scmp.eq.s32.totalorder %s24, 1
      %p68 = por %p66, %p67
      %p70 = scmp.ne.s32.totalorder %s59, %s69
      %p71 = scmp.eq.s32.totalorder %s24, 0
      %p72 = por %p70, %p71
      %p73 = scmp.lt.s32.totalorder %s19, 2
      // Predicated region
      $region9: #{tpu_custom_call.1} parent=5 // pred_check
        %p74 = pneg %p73
      $region10: #{tpu_custom_call.1} parent=5 // pred_check_branch
        %76 = sbr.rel (%p74) target = $region12
      $region11: #{tpu_custom_call.1} parent=5 // pred_region
        %p77 = pneg %p65
        %p78 = pneg %p62
        %s79 = sand.u32 %s56, 1
        %s80 = scalar_lea.sflag [#allocation6], %s79
        %s81 = sand.u32 %s56, 1
        %s82 = smul.addr %s81, 32
        %s83 = scalar_lea.vmem [#allocation5], %s82
        %s84 = smul.u32 4, %s26
        %s85 = sld [smem:[#allocation3 + %s25]]
        %s86 = smul.u32 %s27, 8
        %v87 = vlaneseq
        %v88 = vshrl.u32 %v87, 7
        %v89 = vstv %s86
        %v90 = vadd.s32 %v89, %v88
        %s91 = smul.u32 %s28, 8
        %v92 = vlaneseq
        %v93 = vand.u32 %v92, 127
        %v94 = vstv %s91
        %v95 = vadd.s32 %v94, %v93
        %v96 = vstv %s85
        %v97 = vadd.s32 %v90, %v96
        %v98 = vsub.s32 %v95, %v97
        %vm99 = vcmp.lt.s32.totalorder %v98, 0
        %v100 = vsub.s32 0, %v98
        %v101 = vsel %vm99, %v100, %v98
        %v102 = vcvt.s32.f32 %v101
        %v103 = vsub.f32 0.0, %v102
        %s104 = smul.u32 %s26, 4
        %s105 = sld [smem:[#allocation4 + %s104]]
        %v106 = vstv %s105
        %v107 = vmul.f32 %v103, %v106
        %vm108 = vcmask 64512
        %109 = vst.msk [vmem:[%s83] sm:$0xff] %vm108, %v107
        %s110 = sadd.s32 %s104, 1
        %s111 = sld [smem:[#allocation4 + %s110]]
        %v112 = vstv %s111
        %v113 = vmul.f32 %v103, %v112
        %s114 = scalar_lea.vmem %s83, 8 [#allocation5]
        %115 = vst.msk [vmem:[%s114] sm:$0xff] %vm108, %v113
        %s116 = sadd.s32 %s104, 2
        %s117 = sld [smem:[#allocation4 + %s116]]
        %v118 = vstv %s117
        %v119 = vmul.f32 %v103, %v118
        %s120 = scalar_lea.vmem %s83, 16 [#allocation5]
        %121 = vst.msk [vmem:[%s120] sm:$0xff] %vm108, %v119
        %s122 = sadd.s32 %s104, 3
        %s123 = sld [smem:[#allocation4 + %s122]]
        %v124 = vstv %s123
        %v125 = vmul.f32 %v103, %v124
        %s126 = scalar_lea.vmem %s83, 24 [#allocation5]
        %127 = vst.msk [vmem:[%s126] sm:$0xff] %vm108, %v125
        %s128 = sand.u32 %s56, 1
        %s129 = scalar_lea.sflag [#allocation6], %s128
        %s130 = sand.u32 %s56, 1
        %s131 = smul.addr %s130, 32
        %s132 = scalar_lea.vmem [#allocation5], %s131
        // Predicated region
        $region13: #{tpu_custom_call.1} parent=11 // pred_check
          %p133 = pneg %p62
        $region14: #{tpu_custom_call.1} parent=11 // pred_check_branch
          %135 = sbr.rel (%p133) target = $region16
        $region15: #{tpu_custom_call.1} parent=11 // pred_region
          %s136 = smul.u32 4, %s26
          %s138 = ssub.s32 512, 512
          %139 = vsyncadd %s129, %s138
          %s140 = sadd.s32 %s28, %s27
          %s141 = sadd.s32 %s140, %s136
          %s142 = smul.addr %s25, 4
          %s143 = sadd.s32 %s141, %s142
          %s144 = smul.addr %s143, 128
          %s145 = scalar_lea.hbm %s2, %s144
          %s146 = sshll.u32 %s132, 4
          %s147 = int_to_ptr.vmem [resolvable:$true] %s146
          %152 = dma.vmem_to_hbm [thread:$0]  %s147, 512, %s145, %s129, 128, 128, 8
        $region16: #{tpu_custom_call.1} parent=11 // pred_fallthru
          _
      $region12: #{tpu_custom_call.1} parent=5 // pred_fallthru
        _
      %p153 = scmp.le.s32.totalorder 1, %s19
      // Predicated region
      $region17: #{tpu_custom_call.1} parent=5 // pred_check
        %p154 = pneg %p153
      $region18: #{tpu_custom_call.1} parent=5 // pred_check_branch
        %156 = sbr.rel (%p154) target = $region20
      $region19: #{tpu_custom_call.1} parent=5 // pred_region
        %s157 = ssub.s32 %s19, 1
        // Predicated region
        $region21: #{tpu_custom_call.1} parent=19 // pred_check
          %p158 = pneg %p68
        $region22: #{tpu_custom_call.1} parent=19 // pred_check_branch
          %160 = sbr.rel (%p158) target = $region24
        $region23: #{tpu_custom_call.1} parent=19 // pred_region
          %s161 = sand.u32 %s59, 1
          %s162 = scalar_lea.sflag [#allocation6], %s161
          %s163 = sand.u32 %s59, 1
          %s164 = smul.addr %s163, 32
          %s165 = scalar_lea.vmem [#allocation5], %s164
          %166 = dma.done %s162, 512
        $region24: #{tpu_custom_call.1} parent=19 // pred_fallthru
          _
      $region20: #{tpu_custom_call.1} parent=5 // pred_fallthru
        _
    $region6: #{tpu_custom_call.1} parent=1 // loop_footer
      %s23 = sadd.s32 1, %s19
    $region7: #{tpu_custom_call.1} parent=1 // loop_footer_branch
      %18 = sbr.rel target = $region3
    $region8: #{tpu_custom_call.1} parent=1 // loop_exit
      _
    %167 = vsyncpa [#allocation6], 1
    %s168 = scalar_lea.sflag [#allocation6], 1
    %169 = vsyncpa %s168, 1

</llo_original>
